<compile_context>
chip_gen: v7x
topology: tpu7x:2x2x1
jax: 0.10.0
libtpu: 0.0.40
codegen_flags: <defaults>
</compile_context>

<pallas_src>
import functools

import jax
import jax.numpy as jnp
from jax.experimental import pallas as pl
from jax.experimental.pallas import tpu as pltpu


def _poly_encoding_kernel(x_ref, o_ref, *, dim):
    # x_ref: (1, tN)   -- elements on lanes (lane-major, stays lane-major)
    # o_ref: (dim, tN) -- degree on sublanes, elements on lanes (lane-dense stores)
    x = x_ref[...].astype(jnp.float32)                                    # (1, tN)

    # exponents 1..dim along the sublane (first) axis -- trace-time constant mask
    exps = jax.lax.broadcasted_iota(jnp.int32, (dim, 1), 0) + 1           # (dim, 1)

    nbits = max(1, int(dim).bit_length())

    # bit 0 initializes the accumulator directly (saves one full-tile select+mul)
    out = jnp.where((exps & 1) == 1, x, jnp.float32(1.0))                 # (dim, tN)
    xp = x                                                                # x^(2^b), (1, tN)
    for b in range(1, nbits):                                             # statically unrolled
        xp = xp * xp                                                      # cheap: only (1, tN)
        out = out * jnp.where(((exps >> b) & 1) == 1, xp, jnp.float32(1.0))

    o_ref[...] = out.astype(o_ref.dtype)


def _round_up(x, m):
    return ((x + m - 1) // m) * m


def polynomial_encoding(e, dim, *, target_out_tile_bytes=2 * 1024 * 1024):
    """out[..., k] = e[...] ** (k + 1); returns shape e.shape + (dim,)."""
    orig_shape = e.shape
    flat = e.reshape(-1)
    n = flat.shape[0]
    itemsize = jnp.dtype(e.dtype).itemsize

    # Lane-dense tiling of the flattened element axis: tN is a multiple of 128,
    # sized so one output tile (dim, tN) moves ~target_out_tile_bytes per grid step
    # (fits comfortably in double-buffered VMEM on v5e/v6e/v7x), and the grid has
    # many "parallel" steps for pipelining / megacore sharding.
    n128 = _round_up(max(n, 1), 128)
    t_n = max(128, (target_out_tile_bytes // max(1, dim * itemsize)) // 128 * 128)
    t_n = min(t_n, n128)
    n_pad = _round_up(max(n, 1), t_n)
    grid = (n_pad // t_n,)

    flat = jnp.pad(flat, (0, n_pad - n)).reshape(1, n_pad)

    kernel = functools.partial(_poly_encoding_kernel, dim=dim)
    out_t = pl.pallas_call(
        kernel,
        out_shape=jax.ShapeDtypeStruct((dim, n_pad), e.dtype),
        grid=grid,
        in_specs=[pl.BlockSpec((1, t_n), lambda i: (0, i))],
        out_specs=pl.BlockSpec((dim, t_n), lambda i: (0, i)),
        compiler_params=pltpu.CompilerParams(
            dimension_semantics=("parallel",),
            vmem_limit_bytes=32 * 1024 * 1024,
        ),
    )(flat)

    # Back to the PyTorch layout e.shape + (dim,); the transpose is a cheap XLA op
    # outside the store-bound kernel.
    return out_t[:, :n].T.reshape(*orig_shape, dim)


if __name__ == "__main__":
    B, S, DIM = 2, 8, 16

    key = jax.random.PRNGKey(0)
    e = jax.random.normal(key, (B, S), dtype=jnp.float32)  # includes negative values

    out = polynomial_encoding(e, DIM)
    out = jax.block_until_ready(out)

    # pure-JAX reference (same math as torch.pow(e.unsqueeze(-1), 1 + arange(dim)))
    exponents = jnp.arange(1, DIM + 1, dtype=jnp.float32)
    ref = e[..., None] ** exponents

    assert out.shape == (B, S, DIM), out.shape
    assert out.dtype == jnp.float32, out.dtype
    assert jnp.allclose(out, ref, rtol=1e-5, atol=1e-5), "mismatch vs reference"

    print("KERNEL_OK")
</pallas_src>

<mosaic_0001>
module attributes {stable_mosaic.version = 11 : i64} {
  func.func @_poly_encoding_kernel(%arg0: i32, %arg1: memref<1x128xf32, #tpu.memory_space<vmem>>, %arg2: memref<16x128xf32, #tpu.memory_space<vmem>>) attributes {dimension_semantics = [#tpu.dimension_semantics<parallel>], iteration_bounds = array<i64: 1>, scalar_prefetch = 0 : i64, scratch_operands = 0 : i64, tpu.core_type = #tpu.core_type<tc>, window_params = [{transform_indices = @transform_0, window_bounds = array<i64: 1, 128>}, {transform_indices = @transform_1, window_bounds = array<i64: 16, 128>}]} {
    %c0 = arith.constant 0 : index
    %c0_0 = arith.constant 0 : index
    %0 = vector.load %arg1[%c0, %c0_0] : memref<1x128xf32, #tpu.memory_space<vmem>>, vector<1x128xf32>
    %1 = tpu.iota {dimensions = array<i32: 0>} : vector<16x1xi32>
    %c1_i32 = arith.constant 1 : i32
    %2 = vector.broadcast %c1_i32 : i32 to vector<16x1xi32>
    %3 = arith.addi %1, %2 : vector<16x1xi32>
    %c1_i32_1 = arith.constant 1 : i32
    %4 = vector.broadcast %c1_i32_1 : i32 to vector<16x1xi32>
    %5 = arith.andi %3, %4 : vector<16x1xi32>
    %c1_i32_2 = arith.constant 1 : i32
    %6 = vector.broadcast %c1_i32_2 : i32 to vector<16x1xi32>
    %7 = arith.cmpi eq, %5, %6 : vector<16x1xi32>
    %cst = arith.constant 1.000000e+00 : f32
    %8 = vector.shape_cast %7 : vector<16x1xi1> to vector<16x1xi1>
    %9 = vector.broadcast %8 : vector<16x1xi1> to vector<16x128xi1>
    %10 = vector.shape_cast %0 : vector<1x128xf32> to vector<1x128xf32>
    %11 = vector.broadcast %10 : vector<1x128xf32> to vector<16x128xf32>
    %12 = vector.broadcast %cst : f32 to vector<16x128xf32>
    %13 = arith.select %9, %11, %12 : vector<16x128xi1>, vector<16x128xf32>
    %14 = arith.mulf %0, %0 : vector<1x128xf32>
    %c1_i32_3 = arith.constant 1 : i32
    %15 = vector.broadcast %c1_i32_3 : i32 to vector<16x1xi32>
    %16 = arith.shrsi %3, %15 : vector<16x1xi32>
    %c1_i32_4 = arith.constant 1 : i32
    %17 = vector.broadcast %c1_i32_4 : i32 to vector<16x1xi32>
    %18 = arith.andi %16, %17 : vector<16x1xi32>
    %c1_i32_5 = arith.constant 1 : i32
    %19 = vector.broadcast %c1_i32_5 : i32 to vector<16x1xi32>
    %20 = arith.cmpi eq, %18, %19 : vector<16x1xi32>
    %cst_6 = arith.constant 1.000000e+00 : f32
    %21 = vector.shape_cast %20 : vector<16x1xi1> to vector<16x1xi1>
    %22 = vector.broadcast %21 : vector<16x1xi1> to vector<16x128xi1>
    %23 = vector.shape_cast %14 : vector<1x128xf32> to vector<1x128xf32>
    %24 = vector.broadcast %23 : vector<1x128xf32> to vector<16x128xf32>
    %25 = vector.broadcast %cst_6 : f32 to vector<16x128xf32>
    %26 = arith.select %22, %24, %25 : vector<16x128xi1>, vector<16x128xf32>
    %27 = arith.mulf %13, %26 : vector<16x128xf32>
    %28 = arith.mulf %14, %14 : vector<1x128xf32>
    %c2_i32 = arith.constant 2 : i32
    %29 = vector.broadcast %c2_i32 : i32 to vector<16x1xi32>
    %30 = arith.shrsi %3, %29 : vector<16x1xi32>
    %c1_i32_7 = arith.constant 1 : i32
    %31 = vector.broadcast %c1_i32_7 : i32 to vector<16x1xi32>
    %32 = arith.andi %30, %31 : vector<16x1xi32>
    %c1_i32_8 = arith.constant 1 : i32
    %33 = vector.broadcast %c1_i32_8 : i32 to vector<16x1xi32>
    %34 = arith.cmpi eq, %32, %33 : vector<16x1xi32>
    %cst_9 = arith.constant 1.000000e+00 : f32
    %35 = vector.shape_cast %34 : vector<16x1xi1> to vector<16x1xi1>
    %36 = vector.broadcast %35 : vector<16x1xi1> to vector<16x128xi1>
    %37 = vector.shape_cast %28 : vector<1x128xf32> to vector<1x128xf32>
    %38 = vector.broadcast %37 : vector<1x128xf32> to vector<16x128xf32>
    %39 = vector.broadcast %cst_9 : f32 to vector<16x128xf32>
    %40 = arith.select %36, %38, %39 : vector<16x128xi1>, vector<16x128xf32>
    %41 = arith.mulf %27, %40 : vector<16x128xf32>
    %42 = arith.mulf %28, %28 : vector<1x128xf32>
    %c3_i32 = arith.constant 3 : i32
    %43 = vector.broadcast %c3_i32 : i32 to vector<16x1xi32>
    %44 = arith.shrsi %3, %43 : vector<16x1xi32>
    %c1_i32_10 = arith.constant 1 : i32
    %45 = vector.broadcast %c1_i32_10 : i32 to vector<16x1xi32>
    %46 = arith.andi %44, %45 : vector<16x1xi32>
    %c1_i32_11 = arith.constant 1 : i32
    %47 = vector.broadcast %c1_i32_11 : i32 to vector<16x1xi32>
    %48 = arith.cmpi eq, %46, %47 : vector<16x1xi32>
    %cst_12 = arith.constant 1.000000e+00 : f32
    %49 = vector.shape_cast %48 : vector<16x1xi1> to vector<16x1xi1>
    %50 = vector.broadcast %49 : vector<16x1xi1> to vector<16x128xi1>
    %51 = vector.shape_cast %42 : vector<1x128xf32> to vector<1x128xf32>
    %52 = vector.broadcast %51 : vector<1x128xf32> to vector<16x128xf32>
    %53 = vector.broadcast %cst_12 : f32 to vector<16x128xf32>
    %54 = arith.select %50, %52, %53 : vector<16x128xi1>, vector<16x128xf32>
    %55 = arith.mulf %41, %54 : vector<16x128xf32>
    %56 = arith.mulf %42, %42 : vector<1x128xf32>
    %c4_i32 = arith.constant 4 : i32
    %57 = vector.broadcast %c4_i32 : i32 to vector<16x1xi32>
    %58 = arith.shrsi %3, %57 : vector<16x1xi32>
    %c1_i32_13 = arith.constant 1 : i32
    %59 = vector.broadcast %c1_i32_13 : i32 to vector<16x1xi32>
    %60 = arith.andi %58, %59 : vector<16x1xi32>
    %c1_i32_14 = arith.constant 1 : i32
    %61 = vector.broadcast %c1_i32_14 : i32 to vector<16x1xi32>
    %62 = arith.cmpi eq, %60, %61 : vector<16x1xi32>
    %cst_15 = arith.constant 1.000000e+00 : f32
    %63 = vector.shape_cast %62 : vector<16x1xi1> to vector<16x1xi1>
    %64 = vector.broadcast %63 : vector<16x1xi1> to vector<16x128xi1>
    %65 = vector.shape_cast %56 : vector<1x128xf32> to vector<1x128xf32>
    %66 = vector.broadcast %65 : vector<1x128xf32> to vector<16x128xf32>
    %67 = vector.broadcast %cst_15 : f32 to vector<16x128xf32>
    %68 = arith.select %64, %66, %67 : vector<16x128xi1>, vector<16x128xf32>
    %69 = arith.mulf %55, %68 : vector<16x128xf32>
    %c0_16 = arith.constant 0 : index
    %c0_17 = arith.constant 0 : index
    %70 = vector.load %arg2[%c0_16, %c0_17] : memref<16x128xf32, #tpu.memory_space<vmem>>, vector<16x128xf32>
    tpu.vector_store %arg2[%c0_16, %c0_17], %69 {strides = array<i32>} : memref<16x128xf32, #tpu.memory_space<vmem>>, vector<16x128xf32>,
    return
  }
  func.func @transform_0(%arg0: i32) -> (i32, i32) {
    %c0_i32 = arith.constant 0 : i32
    %c0_i32_0 = arith.constant 0 : i32
    return %c0_i32, %arg0 : i32, i32
  }
  func.func @transform_1(%arg0: i32) -> (i32, i32) {
    %c0_i32 = arith.constant 0 : i32
    %c0_i32_0 = arith.constant 0 : i32
    return %c0_i32, %arg0 : i32, i32
  }
}

</mosaic_0001>

<llo_original>
// kernel: tpu_custom_call.1
$region0: #{tpu_custom_call.1}
  #allocation0 [shape = 'u32[]', space=smem, size = 0x4, offset = 0x4, fixed_abs, tag = 'smem constant byte address 0x4 - core index']
  #allocation1 [shape = 'u32[144,128]{1,0:T(1,128)}', space=vmem, size = 0x12000, scoped, tag = 'internal scratch']
  %s0 = inlined_call_operand.hbm [shape: f32[1,128], index: 0, kind: input, shape index: {}]
  %s1 = inlined_call_operand.hbm [shape: f32[16,128], index: 1, kind: output, shape index: {}]
  %s2 = sld [smem:[#allocation0]]
  $region18: #{tpu_custom_call.1} parent=0
    _
  %s4 = ssub.s32 1, %s2
  %s5 = scalar_select 0, %s4, %s2
  $region1: #{tpu_custom_call.1} parent=0
    #allocation2 [shape = 'u8[512]{0}', space=vmem, size = 0x400, scoped, tag = 'input window, operand 0, single buffered']
    #allocation3 [shape = 's32[1]{0}', space=sflag, size = 0x4, scoped, tag = 'scoped memory for tpu_custom_call.1']
    #allocation4 [shape = 's32[1]{0}', space=sflag, size = 0x4, scoped, tag = 'scoped memory for tpu_custom_call.1']
    #allocation5 [shape = 'u8[8192]{0}', space=vmem, size = 0x2000, scoped, tag = 'output window, operand 0, single buffered']
    %6 = vsyncpa [#allocation3], 0
    %7 = vsyncpa [#allocation4], 0
    // Predicated region
    $region2: #{tpu_custom_call.1} parent=1 // pred_check
      _
    $region3: #{tpu_custom_call.1} parent=1 // pred_check_branch
      %9 = sbr.rel (0) target = $region5
    $region4: #{tpu_custom_call.1} parent=1 // pred_region
      %s11 = ssub.s32 16, 16
      %12 = vsyncadd [#allocation3], %s11
      %s14 = sshll.u32 [#allocation2], 4
      %s15 = int_to_ptr.vmem [resolvable:$true] %s14
      %17 = dma.hbm_to_vmem [thread:$0]  %s0, 16, %s15, [#allocation3]
    $region5: #{tpu_custom_call.1} parent=1 // pred_fallthru
      _
    // Predicated region
    $region6: #{tpu_custom_call.1} parent=1 // pred_check
      _
    $region7: #{tpu_custom_call.1} parent=1 // pred_check_branch
      %19 = sbr.rel (0) target = $region9
    $region8: #{tpu_custom_call.1} parent=1 // pred_region
      %20 = dma.done [#allocation3], 16
    $region9: #{tpu_custom_call.1} parent=1 // pred_fallthru
      _
    %v21 = vld [vmem:[#allocation2] sm:$0x1]
    %v22 = vlaneseq
    %v23 = vshrl.u32 %v22, 7
    %v24 = vadd.s32 %v23, 8
    %v25 = vadd.s32 %v23, 1
    %v26 = vadd.s32 %v24, 1
    %v27 = vand.u32 %v25, 1
    %v28 = vand.u32 %v26, 1
    %vm29 = vcmp.eq.s32.totalorder %v27, 1
    %vm30 = vcmp.eq.s32.totalorder %v28, 1
    %v31 = vsel %vm29, 1, 0
    %v32 = vsel %vm30, 1, 0
    %vm33 = vcmp.eq.s32.totalorder %v31, 1
    %vm34 = vcmp.eq.s32.totalorder %v32, 1
    %v36 = vlaneseq
    %v37 = vshrl.u32 %v36, 7
    %v38 = vsub.s32 0, %v37
    %v39 = vrot.slane %v21, %v38
    %v41 = vsel %vm33, %v39, 1.0
    %v42 = vsel %vm34, %v39, 1.0
    %v43 = vmul.f32 %v21, %v21
    %v44 = vshra.s32 %v25, 1
    %v45 = vshra.s32 %v26, 1
    %v46 = vand.u32 %v44, 1
    %v47 = vand.u32 %v45, 1
    %vm48 = vcmp.eq.s32.totalorder %v46, 1
    %vm49 = vcmp.eq.s32.totalorder %v47, 1
    %v50 = vsel %vm48, 1, 0
    %v51 = vsel %vm49, 1, 0
    %vm52 = vcmp.eq.s32.totalorder %v50, 1
    %vm53 = vcmp.eq.s32.totalorder %v51, 1
    %v55 = vlaneseq
    %v56 = vshrl.u32 %v55, 7
    %v57 = vsub.s32 0, %v56
    %v58 = vrot.slane %v43, %v57
    %v60 = vsel %vm52, %v58, 1.0
    %v61 = vsel %vm53, %v58, 1.0
    %v62 = vmul.f32 %v41, %v60
    %v63 = vmul.f32 %v42, %v61
    %v64 = vmul.f32 %v43, %v43
    %v65 = vshra.s32 %v25, 2
    %v66 = vshra.s32 %v26, 2
    %v67 = vand.u32 %v65, 1
    %v68 = vand.u32 %v66, 1
    %vm69 = vcmp.eq.s32.totalorder %v67, 1
    %vm70 = vcmp.eq.s32.totalorder %v68, 1
    %v71 = vsel %vm69, 1, 0
    %v72 = vsel %vm70, 1, 0
    %vm73 = vcmp.eq.s32.totalorder %v71, 1
    %vm74 = vcmp.eq.s32.totalorder %v72, 1
    %v76 = vlaneseq
    %v77 = vshrl.u32 %v76, 7
    %v78 = vsub.s32 0, %v77
    %v79 = vrot.slane %v64, %v78
    %v81 = vsel %vm73, %v79, 1.0
    %v82 = vsel %vm74, %v79, 1.0
    %v83 = vmul.f32 %v62, %v81
    %v84 = vmul.f32 %v63, %v82
    %v85 = vmul.f32 %v64, %v64
    %v86 = vshra.s32 %v25, 3
    %v87 = vshra.s32 %v26, 3
    %v88 = vand.u32 %v86, 1
    %v89 = vand.u32 %v87, 1
    %vm90 = vcmp.eq.s32.totalorder %v88, 1
    %vm91 = vcmp.eq.s32.totalorder %v89, 1
    %v92 = vsel %vm90, 1, 0
    %v93 = vsel %vm91, 1, 0
    %vm94 = vcmp.eq.s32.totalorder %v92, 1
    %vm95 = vcmp.eq.s32.totalorder %v93, 1
    %v97 = vlaneseq
    %v98 = vshrl.u32 %v97, 7
    %v99 = vsub.s32 0, %v98
    %v100 = vrot.slane %v85, %v99
    %v102 = vsel %vm94, %v100, 1.0
    %v103 = vsel %vm95, %v100, 1.0
    %v104 = vmul.f32 %v83, %v102
    %v105 = vmul.f32 %v84, %v103
    %v106 = vmul.f32 %v85, %v85
    %v107 = vshra.s32 %v25, 4
    %v108 = vshra.s32 %v26, 4
    %v109 = vand.u32 %v107, 1
    %v110 = vand.u32 %v108, 1
    %vm111 = vcmp.eq.s32.totalorder %v109, 1
    %vm112 = vcmp.eq.s32.totalorder %v110, 1
    %v113 = vsel %vm111, 1, 0
    %v114 = vsel %vm112, 1, 0
    %vm115 = vcmp.eq.s32.totalorder %v113, 1
    %vm116 = vcmp.eq.s32.totalorder %v114, 1
    %v118 = vlaneseq
    %v119 = vshrl.u32 %v118, 7
    %v120 = vsub.s32 0, %v119
    %v121 = vrot.slane %v106, %v120
    %v123 = vsel %vm115, %v121, 1.0
    %v124 = vsel %vm116, %v121, 1.0
    %v125 = vmul.f32 %v104, %v123
    %v126 = vmul.f32 %v105, %v124
    %127 = vst [vmem:[#allocation5] sm:$0xff] %v125
    %128 = vst [vmem:[#allocation5 + $0x8] sm:$0xff] %v126
    // Predicated region
    $region10: #{tpu_custom_call.1} parent=1 // pred_check
      _
    $region11: #{tpu_custom_call.1} parent=1 // pred_check_branch
      %130 = sbr.rel (0) target = $region13
    $region12: #{tpu_custom_call.1} parent=1 // pred_region
      %s132 = ssub.s32 256, 256
      %133 = vsyncadd [#allocation4], %s132
      %s134 = sshll.u32 [#allocation5], 4
      %s135 = int_to_ptr.vmem [resolvable:$true] %s134
      %140 = dma.vmem_to_hbm [thread:$0]  %s135, 256, %s1, [#allocation4], 128, 128, 8
    $region13: #{tpu_custom_call.1} parent=1 // pred_fallthru
      _
    // Predicated region
    $region14: #{tpu_custom_call.1} parent=1 // pred_check
      _
    $region15: #{tpu_custom_call.1} parent=1 // pred_check_branch
      %142 = sbr.rel (0) target = $region17
    $region16: #{tpu_custom_call.1} parent=1 // pred_region
      %143 = dma.done [#allocation4], 256
    $region17: #{tpu_custom_call.1} parent=1 // pred_fallthru
      _
    %144 = vsyncpa [#allocation3], 1
    %145 = vsyncpa [#allocation4], 1

</llo_original>
